<compile_context>
chip_gen: v6e
topology: v6e:2x2x1
jax: 0.10.0
libtpu: 0.0.40
codegen_flags: <defaults>
</compile_context>

<pallas_src>
import numpy as np
import jax
import jax.numpy as jnp
from jax.experimental import pallas as pl
from jax.experimental.pallas import tpu as pltpu


# ----------------------------------------------------------------------------
# Trace-time constant operators (numpy): separable kernels as banded matrices
# ----------------------------------------------------------------------------
def _gaussian_1d(ksize: int, sigma: float) -> np.ndarray:
    ax = np.arange(ksize, dtype=np.float64) - (ksize - 1) / 2.0
    g = np.exp(-(ax ** 2) / (2.0 * sigma ** 2))
    return g / g.sum()


def _reflect101(i: int, n: int) -> int:
    """cv2 BORDER_REFLECT_101 index mapping."""
    if n == 1:
        return 0
    period = 2 * (n - 1)
    i = abs(i) % period
    return period - i if i >= n else i


def _conv_matrix_reflect101(n: int, k1d: np.ndarray) -> np.ndarray:
    """Banded matrix M s.t. (x @ M)[j] = sum_t k1d[t] * x[reflect(j + t - pad)].

    Row (width) pass is `x @ M`; column (height) pass is `M.T @ x`.
    The reflect-101 boundary is folded into the matrix.
    """
    K = len(k1d)
    pad = K // 2
    M = np.zeros((n, n), dtype=np.float64)
    for j in range(n):
        for t in range(K):
            M[_reflect101(j + t - pad, n), j] += k1d[t]
    return M


def _bilinear_resize_matrix(n_in: int, n_out: int) -> np.ndarray:
    """(n_out, n_in) bilinear (half-pixel-center) resampling matrix."""
    R = np.zeros((n_out, n_in), dtype=np.float64)
    scale = n_in / n_out
    for o in range(n_out):
        src = (o + 0.5) * scale - 0.5
        i0 = int(np.floor(src))
        frac = src - i0
        i0c = min(max(i0, 0), n_in - 1)
        i1c = min(max(i0 + 1, 0), n_in - 1)
        R[o, i0c] += 1.0 - frac
        R[o, i1c] += frac
    return R


def _prefer_left_first(h_in: int, w_in: int, h_out: int, w_out: int) -> bool:
    """Dot-order choice for L(h_out,h_in) @ X(h_in,w_in) @ R(w_in,w_out):
    True  -> compute (L @ X) @ R,   False -> compute L @ (X @ R)."""
    cost_right_first = h_in * w_in * w_out + h_out * h_in * w_out
    cost_left_first = h_out * h_in * w_in + h_out * w_in * w_out
    return cost_left_first < cost_right_first


def _vmem_limit_bytes():
    """Generation-aware VMEM limit; None -> compiler default (e.g. interpret)."""
    try:
        if jax.devices()[0].platform == "tpu":
            cap = int(pltpu.get_tpu_info().vmem_capacity_bytes)
            # leave headroom for Mosaic-internal scratch / double buffers:
            # ~112 MiB on v5e/v6e (128 MiB), ~56 MiB on v7x (64 MiB)
            return min(cap - (8 << 20), int(cap * 0.88))
    except Exception:
        pass
    return None


# ----------------------------------------------------------------------------
# Pallas kernel: both degradation stages fused, per-channel, in VMEM
# ----------------------------------------------------------------------------
def _make_fused_kernel(stage1_left_first: bool, stage2_left_first: bool):
    bf16 = jnp.bfloat16
    f32 = jnp.float32

    def _apply_stage(x_bf16, l_ref, r_ref, left_first):
        # y = L @ x @ R with bf16 MXU operands and f32 accumulation.
        if left_first:
            t = jnp.dot(l_ref[...], x_bf16, preferred_element_type=f32)
            return jnp.dot(t.astype(bf16), r_ref[...], preferred_element_type=f32)
        t = jnp.dot(x_bf16, r_ref[...], preferred_element_type=f32)
        return jnp.dot(l_ref[...], t.astype(bf16), preferred_element_type=f32)

    def kernel(x_ref, n1_ref, n2_ref, l1_ref, r1_ref, l2_ref, r2_ref, o_ref):
        # ---- stage 1: 7x7 Gaussian blur (sigma=1.6) + noise + clip -------
        x = x_ref[0].astype(bf16)                                   # (H, W)
        y1 = _apply_stage(x, l1_ref, r1_ref, stage1_left_first)     # (H, W) f32
        y1 = jnp.clip(y1 + n1_ref[0].astype(f32), 0.0, 1.0)

        # ---- stage 2: blur(0.8) o anti-alias o bilinear /scale + noise ---
        y2 = _apply_stage(y1.astype(bf16), l2_ref, r2_ref,
                          stage2_left_first)                        # (Ho, Wo)
        y2 = jnp.clip(y2 + n2_ref[0].astype(f32), 0.0, 1.0)

        # 8-bit quantize; y2 already in [0,1] so no extra clip needed.
        y2 = jnp.round(y2 * 255.0) * jnp.float32(1.0 / 255.0)
        o_ref[0] = y2.astype(o_ref.dtype)

    return kernel


# ----------------------------------------------------------------------------
# Public wrapper: deterministic realization of RealESRTransform.forward
# ----------------------------------------------------------------------------
def realesr_transform(image_hwc, scale: float = 2.0, *, noise_seed: int = 0):
    """image_hwc: (H, W, C) float32 in [0,1] -> (H/scale, W/scale, C) in [0,1]."""
    org_h, org_w = int(image_hwc.shape[0]), int(image_hwc.shape[1])
    C = int(image_hwc.shape[2])
    new_h, new_w = int(org_h / scale), int(org_w / scale)
    x = jnp.transpose(image_hwc, (2, 0, 1)).astype(jnp.float32)     # (C, H, W)

    # ---- stage 1 operators: iso Gaussian 7x7 sigma=1.6, resize pinned 'keep'
    g1 = _gaussian_1d(7, 1.6)
    left1 = _conv_matrix_reflect101(org_h, g1).T                    # (H, H)
    right1 = _conv_matrix_reflect101(org_w, g1)                     # (W, W)

    # ---- stage 2 operators: blur(sigma=0.8) o anti-alias Gaussian o bilinear
    #      downsample to (H/scale, W/scale); composed into one L and one R.
    g2 = _gaussian_1d(7, 0.8)
    aa_sigma = max((scale - 1.0) / 2.0, 1e-3)
    aa_size = 2 * int(np.ceil(3.0 * aa_sigma)) + 1
    gaa = _gaussian_1d(aa_size, aa_sigma)
    m2h = _conv_matrix_reflect101(org_h, g2)
    m2w = _conv_matrix_reflect101(org_w, g2)
    mah = _conv_matrix_reflect101(org_h, gaa)
    maw = _conv_matrix_reflect101(org_w, gaa)
    rh = _bilinear_resize_matrix(org_h, new_h)                      # (Ho, H)
    rw = _bilinear_resize_matrix(org_w, new_w)                      # (Wo, W)
    left2 = rh @ mah.T @ m2h.T                                      # (Ho, H)
    right2 = m2w @ maw @ rw.T                                       # (W, Wo)

    # bf16 MXU operands (f32 accumulation happens inside the kernel).
    L1 = jnp.asarray(left1, jnp.bfloat16)
    R1 = jnp.asarray(right1, jnp.bfloat16)
    L2 = jnp.asarray(left2, jnp.bfloat16)
    R2 = jnp.asarray(right2, jnp.bfloat16)

    # ---- Gaussian noise (pinned branch: colour Gaussian, sigma 15/255 then
    # 10/255), precomputed with jax.random and stored bf16 to halve HBM read.
    k1, k2 = jax.random.split(jax.random.PRNGKey(noise_seed))
    n1 = (jnp.float32(15.0 / 255.0)
          * jax.random.normal(k1, (C, org_h, org_w), dtype=jnp.float32)
          ).astype(jnp.bfloat16)
    n2 = (jnp.float32(10.0 / 255.0)
          * jax.random.normal(k2, (C, new_h, new_w), dtype=jnp.float32)
          ).astype(jnp.bfloat16)

    s1_left_first = _prefer_left_first(org_h, org_w, org_h, org_w)
    s2_left_first = _prefer_left_first(org_h, org_w, new_h, new_w)
    kernel = _make_fused_kernel(s1_left_first, s2_left_first)

    # Final sinc branch is pinned to the pulse kernel (identity 21x21 filter)
    # and the final resize is already at target size -> both dropped (no-ops).
    # TODO(synk): both random_jpg_compression round-trips skipped (no Pallas
    # equivalent of libjpeg encode/decode).
    # TODO(synk): L1/R1/L2/R2 never change across the grid; once supported
    # everywhere, mark them pipeline_mode=pl.Buffered(1) to drop the redundant
    # second pipeline buffer (VMEM headroom on v7x).
    out = pl.pallas_call(
        kernel,
        out_shape=jax.ShapeDtypeStruct((C, new_h, new_w), jnp.float32),
        grid=(C,),
        in_specs=[
            pl.BlockSpec((1, org_h, org_w), lambda c: (c, 0, 0)),   # x
            pl.BlockSpec((1, org_h, org_w), lambda c: (c, 0, 0)),   # noise 1
            pl.BlockSpec((1, new_h, new_w), lambda c: (c, 0, 0)),   # noise 2
            pl.BlockSpec((org_h, org_h), lambda c: (0, 0)),         # L1
            pl.BlockSpec((org_w, org_w), lambda c: (0, 0)),         # R1
            pl.BlockSpec((new_h, org_h), lambda c: (0, 0)),         # L2
            pl.BlockSpec((org_w, new_w), lambda c: (0, 0)),         # R2
        ],
        out_specs=pl.BlockSpec((1, new_h, new_w), lambda c: (c, 0, 0)),
        compiler_params=pltpu.CompilerParams(
            dimension_semantics=("parallel",),      # shards channels on v7x
            vmem_limit_bytes=_vmem_limit_bytes(),   # per-generation limit
        ),
    )(x, n1, n2, L1, R1, L2, R2)

    return jnp.transpose(out, (1, 2, 0))                            # -> HWC


if __name__ == "__main__":
    key = jax.random.PRNGKey(0)
    # small HWC image consistent with the module's numpy-image convention
    image = jax.random.uniform(key, (16, 16, 3), dtype=jnp.float32)
    out = realesr_transform(image, scale=2.0)
    out = jax.block_until_ready(out)
    assert out.shape == (8, 8, 3), out.shape
    assert bool(jnp.all(jnp.isfinite(out)))
    assert bool(jnp.all((out >= 0.0) & (out <= 1.0)))
    print("KERNEL_OK")
</pallas_src>

<mosaic_0001>
module attributes {stable_mosaic.version = 11 : i64} {
  func.func @kernel(%arg0: i32, %arg1: memref<1x16x16xf32, #tpu.memory_space<vmem>>, %arg2: memref<1x16x16xbf16, #tpu.memory_space<vmem>>, %arg3: memref<1x8x8xbf16, #tpu.memory_space<vmem>>, %arg4: memref<16x16xbf16, #tpu.memory_space<vmem>>, %arg5: memref<16x16xbf16, #tpu.memory_space<vmem>>, %arg6: memref<8x16xbf16, #tpu.memory_space<vmem>>, %arg7: memref<16x8xbf16, #tpu.memory_space<vmem>>, %arg8: memref<1x8x8xf32, #tpu.memory_space<vmem>>) attributes {dimension_semantics = [#tpu.dimension_semantics<parallel>], iteration_bounds = array<i64: 3>, scalar_prefetch = 0 : i64, scratch_operands = 0 : i64, tpu.core_type = #tpu.core_type<tc>, window_params = [{transform_indices = @transform_0, window_bounds = array<i64: 1, 16, 16>}, {transform_indices = @transform_1, window_bounds = array<i64: 1, 16, 16>}, {transform_indices = @transform_2, window_bounds = array<i64: 1, 8, 8>}, {pipeline_mode = #tpu.pipeline_mode<synchronous>, transform_indices = @transform_3, window_bounds = array<i64: 16, 16>}, {pipeline_mode = #tpu.pipeline_mode<synchronous>, transform_indices = @transform_4, window_bounds = array<i64: 16, 16>}, {pipeline_mode = #tpu.pipeline_mode<synchronous>, transform_indices = @transform_5, window_bounds = array<i64: 8, 16>}, {pipeline_mode = #tpu.pipeline_mode<synchronous>, transform_indices = @transform_6, window_bounds = array<i64: 16, 8>}, {transform_indices = @transform_7, window_bounds = array<i64: 1, 8, 8>}]} {
    %c0 = arith.constant 0 : index
    %c0_0 = arith.constant 0 : index
    %c0_1 = arith.constant 0 : index
    %0 = vector.load %arg1[%c0, %c0_0, %c0_1] : memref<1x16x16xf32, #tpu.memory_space<vmem>>, vector<1x16x16xf32>
    %1 = vector.shape_cast %0 : vector<1x16x16xf32> to vector<16x16xf32>
    %2 = arith.truncf %1 : vector<16x16xf32> to vector<16x16xbf16>
    %c0_2 = arith.constant 0 : index
    %c0_3 = arith.constant 0 : index
    %3 = vector.load %arg5[%c0_2, %c0_3] : memref<16x16xbf16, #tpu.memory_space<vmem>>, vector<16x16xbf16>
    %cst = arith.constant dense<0.000000e+00> : vector<16x16xf32>
    %4 = tpu.matmul %2, %3, %cst {dimension_numbers = #tpu.dot_dimension_numbers<[1], [0], [0], [1], [0, 0, 1, 1], [], []>} : vector<16x16xbf16>, vector<16x16xbf16>, vector<16x16xf32> -> vector<16x16xf32>
    %c0_4 = arith.constant 0 : index
    %c0_5 = arith.constant 0 : index
    %5 = vector.load %arg4[%c0_4, %c0_5] : memref<16x16xbf16, #tpu.memory_space<vmem>>, vector<16x16xbf16>
    %6 = arith.truncf %4 : vector<16x16xf32> to vector<16x16xbf16>
    %cst_6 = arith.constant dense<0.000000e+00> : vector<16x16xf32>
    %7 = tpu.matmul %5, %6, %cst_6 {dimension_numbers = #tpu.dot_dimension_numbers<[1], [0], [0], [1], [0, 0, 1, 1], [], []>} : vector<16x16xbf16>, vector<16x16xbf16>, vector<16x16xf32> -> vector<16x16xf32>
    %c0_7 = arith.constant 0 : index
    %c0_8 = arith.constant 0 : index
    %c0_9 = arith.constant 0 : index
    %8 = vector.load %arg2[%c0_7, %c0_8, %c0_9] : memref<1x16x16xbf16, #tpu.memory_space<vmem>>, vector<1x16x16xbf16>
    %9 = vector.shape_cast %8 : vector<1x16x16xbf16> to vector<16x16xbf16>
    %10 = arith.extf %9 : vector<16x16xbf16> to vector<16x16xf32>
    %11 = arith.addf %7, %10 : vector<16x16xf32>
    %cst_10 = arith.constant 0.000000e+00 : f32
    %cst_11 = arith.constant 1.000000e+00 : f32
    %12 = vector.broadcast %cst_10 : f32 to vector<16x16xf32>
    %13 = arith.maximumf %12, %11 : vector<16x16xf32>
    %14 = vector.broadcast %cst_11 : f32 to vector<16x16xf32>
    %15 = arith.minimumf %14, %13 : vector<16x16xf32>
    %16 = arith.truncf %15 : vector<16x16xf32> to vector<16x16xbf16>
    %c0_12 = arith.constant 0 : index
    %c0_13 = arith.constant 0 : index
    %17 = vector.load %arg7[%c0_12, %c0_13] : memref<16x8xbf16, #tpu.memory_space<vmem>>, vector<16x8xbf16>
    %cst_14 = arith.constant dense<0.000000e+00> : vector<16x8xf32>
    %18 = tpu.matmul %16, %17, %cst_14 {dimension_numbers = #tpu.dot_dimension_numbers<[1], [0], [0], [1], [0, 0, 1, 1], [], []>} : vector<16x16xbf16>, vector<16x8xbf16>, vector<16x8xf32> -> vector<16x8xf32>
    %c0_15 = arith.constant 0 : index
    %c0_16 = arith.constant 0 : index
    %19 = vector.load %arg6[%c0_15, %c0_16] : memref<8x16xbf16, #tpu.memory_space<vmem>>, vector<8x16xbf16>
    %20 = arith.truncf %18 : vector<16x8xf32> to vector<16x8xbf16>
    %cst_17 = arith.constant dense<0.000000e+00> : vector<8x8xf32>
    %21 = tpu.matmul %19, %20, %cst_17 {dimension_numbers = #tpu.dot_dimension_numbers<[1], [0], [0], [1], [0, 0, 1, 1], [], []>} : vector<8x16xbf16>, vector<16x8xbf16>, vector<8x8xf32> -> vector<8x8xf32>
    %c0_18 = arith.constant 0 : index
    %c0_19 = arith.constant 0 : index
    %c0_20 = arith.constant 0 : index
    %22 = vector.load %arg3[%c0_18, %c0_19, %c0_20] : memref<1x8x8xbf16, #tpu.memory_space<vmem>>, vector<1x8x8xbf16>
    %23 = vector.shape_cast %22 : vector<1x8x8xbf16> to vector<8x8xbf16>
    %24 = arith.extf %23 : vector<8x8xbf16> to vector<8x8xf32>
    %25 = arith.addf %21, %24 : vector<8x8xf32>
    %cst_21 = arith.constant 0.000000e+00 : f32
    %cst_22 = arith.constant 1.000000e+00 : f32
    %26 = vector.broadcast %cst_21 : f32 to vector<8x8xf32>
    %27 = arith.maximumf %26, %25 : vector<8x8xf32>
    %28 = vector.broadcast %cst_22 : f32 to vector<8x8xf32>
    %29 = arith.minimumf %28, %27 : vector<8x8xf32>
    %cst_23 = arith.constant 2.550000e+02 : f32
    %30 = vector.broadcast %cst_23 : f32 to vector<8x8xf32>
    %31 = arith.mulf %29, %30 : vector<8x8xf32>
    %32 = math.roundeven %31 : vector<8x8xf32>
    %cst_24 = arith.constant 0.00392156886 : f32
    %33 = vector.broadcast %cst_24 : f32 to vector<8x8xf32>
    %34 = arith.mulf %32, %33 : vector<8x8xf32>
    %c0_25 = arith.constant 0 : index
    %c0_26 = arith.constant 0 : index
    %c0_27 = arith.constant 0 : index
    %35 = vector.load %arg8[%c0_25, %c0_26, %c0_27] : memref<1x8x8xf32, #tpu.memory_space<vmem>>, vector<1x8x8xf32>
    %36 = vector.shape_cast %35 : vector<1x8x8xf32> to vector<8x8xf32>
    %37 = vector.shape_cast %34 : vector<8x8xf32> to vector<1x8x8xf32>
    tpu.vector_store %arg8[%c0_25, %c0_26, %c0_27], %37 {strides = array<i32>} : memref<1x8x8xf32, #tpu.memory_space<vmem>>, vector<1x8x8xf32>,
    return
  }
  func.func @transform_0(%arg0: i32) -> (i32, i32, i32) {
    %c0_i32 = arith.constant 0 : i32
    %c0_i32_0 = arith.constant 0 : i32
    %c0_i32_1 = arith.constant 0 : i32
    return %arg0, %c0_i32, %c0_i32_0 : i32, i32, i32
  }
  func.func @transform_1(%arg0: i32) -> (i32, i32, i32) {
    %c0_i32 = arith.constant 0 : i32
    %c0_i32_0 = arith.constant 0 : i32
    %c0_i32_1 = arith.constant 0 : i32
    return %arg0, %c0_i32, %c0_i32_0 : i32, i32, i32
  }
  func.func @transform_2(%arg0: i32) -> (i32, i32, i32) {
    %c0_i32 = arith.constant 0 : i32
    %c0_i32_0 = arith.constant 0 : i32
    %c0_i32_1 = arith.constant 0 : i32
    return %arg0, %c0_i32, %c0_i32_0 : i32, i32, i32
  }
  func.func @transform_3(%arg0: i32) -> (i32, i32) {
    %c0_i32 = arith.constant 0 : i32
    %c0_i32_0 = arith.constant 0 : i32
    %c0_i32_1 = arith.constant 0 : i32
    return %c0_i32, %c0_i32_0 : i32, i32
  }
  func.func @transform_4(%arg0: i32) -> (i32, i32) {
    %c0_i32 = arith.constant 0 : i32
    %c0_i32_0 = arith.constant 0 : i32
    %c0_i32_1 = arith.constant 0 : i32
    return %c0_i32, %c0_i32_0 : i32, i32
  }
  func.func @transform_5(%arg0: i32) -> (i32, i32) {
    %c0_i32 = arith.constant 0 : i32
    %c0_i32_0 = arith.constant 0 : i32
    %c0_i32_1 = arith.constant 0 : i32
    return %c0_i32, %c0_i32_0 : i32, i32
  }
  func.func @transform_6(%arg0: i32) -> (i32, i32) {
    %c0_i32 = arith.constant 0 : i32
    %c0_i32_0 = arith.constant 0 : i32
    %c0_i32_1 = arith.constant 0 : i32
    return %c0_i32, %c0_i32_0 : i32, i32
  }
  func.func @transform_7(%arg0: i32) -> (i32, i32, i32) {
    %c0_i32 = arith.constant 0 : i32
    %c0_i32_0 = arith.constant 0 : i32
    %c0_i32_1 = arith.constant 0 : i32
    return %arg0, %c0_i32, %c0_i32_0 : i32, i32, i32
  }
}

</mosaic_0001>

<llo_original>
// kernel: tpu_custom_call.1
$region0: #{tpu_custom_call.1}
  #allocation0 [shape = 'u32[]', space=smem, size = 0x4, offset = 0x4, fixed_abs, tag = 'smem constant byte address 0x4 - core index']
  #allocation1 [shape = 'u32[144,128]{1,0:T(1,128)}', space=vmem, size = 0x12000, scoped, tag = 'internal scratch']
  %s0 = inlined_call_operand.hbm [shape: f32[3,16,16], index: 0, kind: input, shape index: {}]
  %s1 = inlined_call_operand.hbm [shape: bf16[3,16,16], index: 1, kind: input, shape index: {}]
  %s2 = inlined_call_operand.vmem [shape: bf16[3,8,8], index: 2, kind: input, shape index: {}]
  %s3 = inlined_call_operand.hbm [shape: bf16[16,16], index: 3, kind: input, shape index: {}]
  %s4 = inlined_call_operand.hbm [shape: bf16[16,16], index: 4, kind: input, shape index: {}]
  %s5 = inlined_call_operand.vmem [shape: bf16[8,16], index: 5, kind: input, shape index: {}]
  %s6 = inlined_call_operand.vmem [shape: bf16[16,8], index: 6, kind: input, shape index: {}]
  %s7 = inlined_call_operand.hbm [shape: f32[3,8,8], index: 7, kind: output, shape index: {}]
  %s8 = sld [smem:[#allocation0]]
  $region77: #{tpu_custom_call.1} parent=0
    _
  %s10 = ssub.s32 1, %s8
  %s11 = scalar_select 0, %s10, %s8
  $region1: #{tpu_custom_call.1} parent=0
    #allocation2 [shape = 'u8[16384]{0}', space=vmem, size = 0x4000, scoped, tag = 'input window, operand 0']
    #allocation3 [shape = 's32[2]{0}', space=sflag, size = 0x8, scoped, tag = 'scoped memory for tpu_custom_call.1']
    #allocation4 [shape = 's32[2]{0}', space=sflag, size = 0x8, scoped, tag = 'scoped memory for tpu_custom_call.1']
    #allocation5 [shape = 'u8[8192]{0}', space=vmem, size = 0x2000, scoped, tag = 'input window, operand 1']
    #allocation6 [shape = 's32[2]{0}', space=sflag, size = 0x8, scoped, tag = 'scoped memory for tpu_custom_call.1']
    #allocation7 [shape = 'u8[4096]{0}', space=vmem, size = 0x1000, scoped, tag = 'input window, operand 3, single buffered']
    #allocation8 [shape = 'u8[4096]{0}', space=vmem, size = 0x1000, scoped, tag = 'input window, operand 4, single buffered']
    #allocation9 [shape = 's32[1]{0}', space=sflag, size = 0x4, scoped, tag = 'scoped memory for tpu_custom_call.1']
    #allocation10 [shape = 'u8[8192]{0}', space=vmem, size = 0x2000, scoped, tag = 'output window, operand 0']
    %12 = vsyncpa [#allocation3], 0
    %s13 = scalar_lea.sflag [#allocation3], 1
    %14 = vsyncpa %s13, 0
    %15 = vsyncpa [#allocation6], 0
    %s16 = scalar_lea.sflag [#allocation6], 1
    %17 = vsyncpa %s16, 0
    %18 = vsyncpa [#allocation9], 0
    %19 = vsyncpa [#allocation4], 0
    %s20 = scalar_lea.sflag [#allocation4], 1
    %21 = vsyncpa %s20, 0
    loop: start=0, step=1, limit=5
    $region2: #{tpu_custom_call.1} parent=1 // loop_pre_header
      _
    $region3: #{tpu_custom_call.1} parent=1 // loop_header
      %s23 = sphi 0, %s27
      %p24 = scmp.ge.s32.totalorder %s23, 5
      %s33 = sphi 0, %s35
      %s36 = sphi 0, %s33
      %s37 = sphi 0, %s36
      %s53 = sphi 0, %s37
      %s59 = sphi 0, %s61
      %s62 = sphi 0, %s59
      %s63 = sphi 0, %s62
      %s79 = sphi 0, %s63
      %s85 = sphi 0, %s87
      %s88 = sphi 0, %s85
      %s89 = sphi 0, %s88
      %s105 = sphi 0, %s89
      %s109 = sphi 0, %s109
      %s111 = sphi 0, %s109
      %s112 = sphi 0, %s111
      %s126 = sphi 0, %s112
      %s130 = sphi 0, %s130
      %s132 = sphi 0, %s130
      %s133 = sphi 0, %s132
      %s147 = sphi 0, %s133
      %s151 = sphi 0, %s151
      %s153 = sphi 0, %s151
      %s154 = sphi 0, %s153
      %s168 = sphi 0, %s154
      %s172 = sphi 0, %s172
      %s174 = sphi 0, %s172
      %s175 = sphi 0, %s174
      %s189 = sphi 0, %s175
      %s195 = sphi 0, %s197
      %s198 = sphi 0, %s195
      %s199 = sphi 0, %s198
      %s215 = sphi 0, %s199
    $region4: #{tpu_custom_call.1} parent=1 // loop_header_branch
      %26 = sbr.rel (%p24) target = $region8
    $region5: #{tpu_custom_call.1} parent=1 // loop_body
      %s28 = ssub.s32 %s23, 1
      %s29 = ssub.s32 %s23, 2
      %s30 = sadd.s32 %s23, 1
      %s31 = ssub.s32 %s23, %s30
      %p32 = scmp.eq.s32.totalorder %s31, 0
      %s34 = sadd.s32 %s33, 1
      %s35 = scalar_select %p32, %s33, %s34
      %p38 = pneg %p32
      %p39 = scmp.eq.s32.totalorder %s23, 2
      %p40 = por %p38, %p39
      %p41 = scmp.ne.s32.totalorder %s33, %s36
      %p42 = scmp.eq.s32.totalorder %s23, 0
      %p43 = por %p41, %p42
      %p44 = scmp.ne.s32.totalorder %s33, %s36
      %p45 = scmp.eq.s32.totalorder %s28, 2
      %p46 = por %p44, %p45
      %p47 = scmp.ne.s32.totalorder %s36, %s37
      %p48 = scmp.eq.s32.totalorder %s28, 0
      %p49 = por %p47, %p48
      %p50 = scmp.ne.s32.totalorder %s36, %s37
      %p51 = scmp.eq.s32.totalorder %s29, 2
      %p52 = por %p50, %p51
      %p54 = scmp.ne.s32.totalorder %s37, %s53
      %p55 = scmp.eq.s32.totalorder %s29, 0
      %p56 = por %p54, %p55
      %s57 = ssub.s32 %s23, %s30
      %p58 = scmp.eq.s32.totalorder %s57, 0
      %s60 = sadd.s32 %s59, 1
      %s61 = scalar_select %p58, %s59, %s60
      %p64 = pneg %p58
      %p65 = scmp.eq.s32.totalorder %s23, 2
      %p66 = por %p64, %p65
      %p67 = scmp.ne.s32.totalorder %s59, %s62
      %p68 = scmp.eq.s32.totalorder %s23, 0
      %p69 = por %p67, %p68
      %p70 = scmp.ne.s32.totalorder %s59, %s62
      %p71 = scmp.eq.s32.totalorder %s28, 2
      %p72 = por %p70, %p71
      %p73 = scmp.ne.s32.totalorder %s62, %s63
      %p74 = scmp.eq.s32.totalorder %s28, 0
      %p75 = por %p73, %p74
      %p76 = scmp.ne.s32.totalorder %s62, %s63
      %p77 = scmp.eq.s32.totalorder %s29, 2
      %p78 = por %p76, %p77
      %p80 = scmp.ne.s32.totalorder %s63, %s79
      %p81 = scmp.eq.s32.totalorder %s29, 0
      %p82 = por %p80, %p81
      %s83 = ssub.s32 %s23, %s30
      %p84 = scmp.eq.s32.totalorder %s83, 0
      %s86 = sadd.s32 %s85, 1
      %s87 = scalar_select %p84, %s85, %s86
      %p90 = pneg %p84
      %p91 = scmp.eq.s32.totalorder %s23, 2
      %p92 = por %p90, %p91
      %p93 = scmp.ne.s32.totalorder %s85, %s88
      %p94 = scmp.eq.s32.totalorder %s23, 0
      %p95 = por %p93, %p94
      %p96 = scmp.ne.s32.totalorder %s85, %s88
      %p97 = scmp.eq.s32.totalorder %s28, 2
      %p98 = por %p96, %p97
      %p99 = scmp.ne.s32.totalorder %s88, %s89
      %p100 = scmp.eq.s32.totalorder %s28, 0
      %p101 = por %p99, %p100
      %p102 = scmp.ne.s32.totalorder %s88, %s89
      %p103 = scmp.eq.s32.totalorder %s29, 2
      %p104 = por %p102, %p103
      %p106 = scmp.ne.s32.totalorder %s89, %s105
      %p107 = scmp.eq.s32.totalorder %s29, 0
      %p108 = por %p106, %p107
      %s110 = sadd.s32 %s109, 1
      %p113 = scmp.eq.s32.totalorder %s23, 2
      %p114 = scmp.ne.s32.totalorder %s109, %s111
      %p115 = scmp.eq.s32.totalorder %s23, 0
      %p116 = por %p114, %p115
      %p117 = scmp.ne.s32.totalorder %s109, %s111
      %p118 = scmp.eq.s32.totalorder %s28, 2
      %p119 = por %p117, %p118
      %p120 = scmp.ne.s32.totalorder %s111, %s112
      %p121 = scmp.eq.s32.totalorder %s28, 0
      %p122 = por %p120, %p121
      %p123 = scmp.ne.s32.totalorder %s111, %s112
      %p124 = scmp.eq.s32.totalorder %s29, 2
      %p125 = por %p123, %p124
      %p127 = scmp.ne.s32.totalorder %s112, %s126
      %p128 = scmp.eq.s32.totalorder %s29, 0
      %p129 = por %p127, %p128
      %s131 = sadd.s32 %s130, 1
      %p134 = scmp.eq.s32.totalorder %s23, 2
      %p135 = scmp.ne.s32.totalorder %s130, %s132
      %p136 = scmp.eq.s32.totalorder %s23, 0
      %p137 = por %p135, %p136
      %p138 = scmp.ne.s32.totalorder %s130, %s132
      %p139 = scmp.eq.s32.totalorder %s28, 2
      %p140 = por %p138, %p139
      %p141 = scmp.ne.s32.totalorder %s132, %s133
      %p142 = scmp.eq.s32.totalorder %s28, 0
      %p143 = por %p141, %p142
      %p144 = scmp.ne.s32.totalorder %s132, %s133
      %p145 = scmp.eq.s32.totalorder %s29, 2
      %p146 = por %p144, %p145
      %p148 = scmp.ne.s32.totalorder %s133, %s147
      %p149 = scmp.eq.s32.totalorder %s29, 0
      %p150 = por %p148, %p149
      %s152 = sadd.s32 %s151, 1
      %p155 = scmp.eq.s32.totalorder %s23, 2
      %p156 = scmp.ne.s32.totalorder %s151, %s153
      %p157 = scmp.eq.s32.totalorder %s23, 0
      %p158 = por %p156, %p157
      %p159 = scmp.ne.s32.totalorder %s151, %s153
      %p160 = scmp.eq.s32.totalorder %s28, 2
      %p161 = por %p159, %p160
      %p162 = scmp.ne.s32.totalorder %s153, %s154
      %p163 = scmp.eq.s32.totalorder %s28, 0
      %p164 = por %p162, %p163
      %p165 = scmp.ne.s32.totalorder %s153, %s154
      %p166 = scmp.eq.s32.totalorder %s29, 2
      %p167 = por %p165, %p166
      %p169 = scmp.ne.s32.totalorder %s154, %s168
      %p170 = scmp.eq.s32.totalorder %s29, 0
      %p171 = por %p169, %p170
      %s173 = sadd.s32 %s172, 1
      %p176 = scmp.eq.s32.totalorder %s23, 2
      %p177 = scmp.ne.s32.totalorder %s172, %s174
      %p178 = scmp.eq.s32.totalorder %s23, 0
      %p179 = por %p177, %p178
      %p180 = scmp.ne.s32.totalorder %s172, %s174
      %p181 = scmp.eq.s32.totalorder %s28, 2
      %p182 = por %p180, %p181
      %p183 = scmp.ne.s32.totalorder %s174, %s175
      %p184 = scmp.eq.s32.totalorder %s28, 0
      %p185 = por %p183, %p184
      %p186 = scmp.ne.s32.totalorder %s174, %s175
      %p187 = scmp.eq.s32.totalorder %s29, 2
      %p188 = por %p186, %p187
      %p190 = scmp.ne.s32.totalorder %s175, %s189
      %p191 = scmp.eq.s32.totalorder %s29, 0
      %p192 = por %p190, %p191
      %s193 = ssub.s32 %s23, %s30
      %p194 = scmp.eq.s32.totalorder %s193, 0
      %s196 = sadd.s32 %s195, 1
      %s197 = scalar_select %p194, %s195, %s196
      %p200 = pneg %p194
      %p201 = scmp.eq.s32.totalorder %s23, 2
      %p202 = por %p200, %p201
      %p203 = scmp.ne.s32.totalorder %s195, %s198
      %p204 = scmp.eq.s32.totalorder %s23, 0
      %p205 = por %p203, %p204
      %p206 = scmp.ne.s32.totalorder %s195, %s198
      %p207 = scmp.eq.s32.totalorder %s28, 2
      %p208 = por %p206, %p207
      %p209 = scmp.ne.s32.totalorder %s198, %s199
      %p210 = scmp.eq.s32.totalorder %s28, 0
      %p211 = por %p209, %p210
      %p212 = scmp.ne.s32.totalorder %s198, %s199
      %p213 = scmp.eq.s32.totalorder %s29, 2
      %p214 = por %p212, %p213
      %p216 = scmp.ne.s32.totalorder %s199, %s215
      %p217 = scmp.eq.s32.totalorder %s29, 0
      %p218 = por %p216, %p217
      %p219 = scmp.le.s32.totalorder 1, %s23
      %p220 = scmp.lt.s32.totalorder %s23, 4
      %p221 = pnand %p219, %p220
      %p222 = pneg %p221
      // Predicated region
      $region9: #{tpu_custom_call.1} parent=5 // pred_check
        _
      $region10: #{tpu_custom_call.1} parent=5 // pred_check_branch
        %224 = sbr.rel (%p221) target = $region12
      $region11: #{tpu_custom_call.1} parent=5 // pred_region
        %s225 = ssub.s32 %s23, 1
        // Predicated region
        $region13: #{tpu_custom_call.1} parent=11 // pred_check
          %p226 = pneg %p122
        $region14: #{tpu_custom_call.1} parent=11 // pred_check_branch
          %228 = sbr.rel (%p226) target = $region16
        $region15: #{tpu_custom_call.1} parent=11 // pred_region
          %s230 = ssub.s32 128, 128
          %231 = vsyncadd [#allocation6], %s230
          %s232 = sshll.u32 [#allocation7], 4
          %s233 = int_to_ptr.vmem [resolvable:$true] %s232
          %238 = dma.hbm_to_vmem [thread:$0]  %s3, 128, %s233, [#allocation6], 64, 64, 4
        $region16: #{tpu_custom_call.1} parent=11 // pred_fallthru
          _
        // Predicated region
        $region17: #{tpu_custom_call.1} parent=11 // pred_check
          %p239 = pneg %p143
        $region18: #{tpu_custom_call.1} parent=11 // pred_check_branch
          %241 = sbr.rel (%p239) target = $region20
        $region19: #{tpu_custom_call.1} parent=11 // pred_region
          %s243 = ssub.s32 128, 128
          %244 = vsyncadd [#allocation9], %s243
          %s245 = sshll.u32 [#allocation8], 4
          %s246 = int_to_ptr.vmem [resolvable:$true] %s245
          %251 = dma.hbm_to_vmem [thread:$0]  %s4, 128, %s246, [#allocation9], 64, 64, 4
        $region20: #{tpu_custom_call.1} parent=11 // pred_fallthru
          _
        // Predicated region
        $region21: #{tpu_custom_call.1} parent=11 // pred_check
          %p252 = pneg %p164
        $region22: #{tpu_custom_call.1} parent=11 // pred_check_branch
          %254 = sbr.rel (%p252) target = $region24
        $region23: #{tpu_custom_call.1} parent=11 // pred_region
          _
        $region24: #{tpu_custom_call.1} parent=11 // pred_fallthru
          _
        // Predicated region
        $region25: #{tpu_custom_call.1} parent=11 // pred_check
          %p255 = pneg %p185
        $region26: #{tpu_custom_call.1} parent=11 // pred_check_branch
          %257 = sbr.rel (%p255) target = $region28
        $region27: #{tpu_custom_call.1} parent=11 // pred_region
          _
        $region28: #{tpu_custom_call.1} parent=11 // pred_fallthru
          _
      $region12: #{tpu_custom_call.1} parent=5 // pred_fallthru
        _
      %p258 = scmp.lt.s32.totalorder %s23, 3
      // Predicated region
      $region29: #{tpu_custom_call.1} parent=5 // pred_check
        %p259 = pneg %p258
      $region30: #{tpu_custom_call.1} parent=5 // pred_check_branch
        %261 = sbr.rel (%p259) target = $region32
      $region31: #{tpu_custom_call.1} parent=5 // pred_region
        // Predicated region
        $region33: #{tpu_custom_call.1} parent=31 // pred_check
          %p262 = pneg %p43
        $region34: #{tpu_custom_call.1} parent=31 // pred_check_branch
          %264 = sbr.rel (%p262) target = $region36
        $region35: #{tpu_custom_call.1} parent=31 // pred_region
          %s265 = sand.u32 %s33, 1
          %s266 = scalar_lea.sflag [#allocation3], %s265
          %s267 = sand.u32 %s33, 1
          %s268 = smul.addr %s267, 16
          %s269 = scalar_lea.vmem [#allocation2], %s268
          %s271 = ssub.s32 256, 256
          %272 = vsyncadd %s266, %s271
          %s273 = smul.addr %s23, 2
          %s274 = smul.addr %s273, 128
          %s275 = scalar_lea.hbm %s0, %s274
          %s276 = sshll.u32 %s269, 4
          %s277 = int_to_ptr.vmem [resolvable:$true] %s276
          %282 = dma.hbm_to_vmem [thread:$0]  %s275, 256, %s277, %s266, 128, 128, 8
        $region36: #{tpu_custom_call.1} parent=31 // pred_fallthru
          _
        // Predicated region
        $region37: #{tpu_custom_call.1} parent=31 // pred_check
          %p283 = pneg %p69
        $region38: #{tpu_custom_call.1} parent=31 // pred_check_branch
          %285 = sbr.rel (%p283) target = $region40
        $region39: #{tpu_custom_call.1} parent=31 // pred_region
          %s286 = sand.u32 %s23, 1
          %s287 = scalar_lea.sflag [#allocation6], %s286
          %s288 = sand.u32 %s59, 1
          %s289 = smul.addr %s288, 8
          %s290 = scalar_lea.vmem [#allocation5], %s289
          %s292 = ssub.s32 128, 128
          %293 = vsyncadd %s287, %s292
          %s294 = smul.addr %s23, 2
          %s295 = smul.addr %s294, 64
          %s296 = scalar_lea.hbm %s1, %s295
          %s297 = sshll.u32 %s290, 4
          %s298 = int_to_ptr.vmem [resolvable:$true] %s297
          %303 = dma.hbm_to_vmem [thread:$0]  %s296, 128, %s298, %s287, 64, 64, 4
        $region40: #{tpu_custom_call.1} parent=31 // pred_fallthru
          _
        // Predicated region
        $region41: #{tpu_custom_call.1} parent=31 // pred_check
          %p304 = pneg %p95
        $region42: #{tpu_custom_call.1} parent=31 // pred_check_branch
          %306 = sbr.rel (%p304) target = $region44
        $region43: #{tpu_custom_call.1} parent=31 // pred_region
          %p307 = scmp.lt.s32.totalorder %s23, 2
          %s308 = scalar_select %p307, %s23, 2
          %s309 = smul.addr %s308, 4
          %s310 = scalar_lea.vmem %s2, %s309
        $region44: #{tpu_custom_call.1} parent=31 // pred_fallthru
          _
      $region32: #{tpu_custom_call.1} parent=5 // pred_fallthru
        _
      %p311 = scmp.le.s32.totalorder 1, %s23
      %p312 = scmp.lt.s32.totalorder %s23, 4
      %p313 = pnand %p311, %p312
      %p314 = pneg %p313
      // Predicated region
      $region45: #{tpu_custom_call.1} parent=5 // pred_check
        _
      $region46: #{tpu_custom_call.1} parent=5 // pred_check_branch
        %316 = sbr.rel (%p313) target = $region48
      $region47: #{tpu_custom_call.1} parent=5 // pred_region
        %s317 = ssub.s32 %s23, 1
        %s318 = sand.u32 %s36, 1
        %s319 = scalar_lea.sflag [#allocation3], %s318
        %s320 = sand.u32 %s36, 1
        %s321 = smul.addr %s320, 16
        %s322 = scalar_lea.vmem [#allocation2], %s321
        // Predicated region
        $region49: #{tpu_custom_call.1} parent=47 // pred_check
          %p323 = pneg %p49
        $region50: #{tpu_custom_call.1} parent=47 // pred_check_branch
          %325 = sbr.rel (%p323) target = $region52
        $region51: #{tpu_custom_call.1} parent=47 // pred_region
          %326 = dma.done %s319, 256
        $region52: #{tpu_custom_call.1} parent=47 // pred_fallthru
          _
        %s327 = sand.u32 %s28, 1
        %s328 = scalar_lea.sflag [#allocation6], %s327
        %s329 = sand.u32 %s62, 1
        %s330 = smul.addr %s329, 8
        %s331 = scalar_lea.vmem [#allocation5], %s330
        // Predicated region
        $region53: #{tpu_custom_call.1} parent=47 // pred_check
          %p332 = pneg %p75
        $region54: #{tpu_custom_call.1} parent=47 // pred_check_branch
          %334 = sbr.rel (%p332) target = $region56
        $region55: #{tpu_custom_call.1} parent=47 // pred_region
          %335 = dma.done %s328, 128
        $region56: #{tpu_custom_call.1} parent=47 // pred_fallthru
          _
        // Predicated region
        $region57: #{tpu_custom_call.1} parent=47 // pred_check
          %p336 = pneg %p122
        $region58: #{tpu_custom_call.1} parent=47 // pred_check_branch
          %338 = sbr.rel (%p336) target = $region60
        $region59: #{tpu_custom_call.1} parent=47 // pred_region
          %339 = dma.done [#allocation6], 128
        $region60: #{tpu_custom_call.1} parent=47 // pred_fallthru
          _
        // Predicated region
        $region61: #{tpu_custom_call.1} parent=47 // pred_check
          %p340 = pneg %p143
        $region62: #{tpu_custom_call.1} parent=47 // pred_check_branch
          %342 = sbr.rel (%p340) target = $region64
        $region63: #{tpu_custom_call.1} parent=47 // pred_region
          %343 = dma.done [#allocation9], 128
        $region64: #{tpu_custom_call.1} parent=47 // pred_fallthru
          _
        %s344 = sand.u32 %s36, 1
        %s345 = scalar_lea.sflag [#allocation3], %s344
        %s346 = sand.u32 %s36, 1
        %s347 = smul.addr %s346, 16
        %s348 = scalar_lea.vmem [#allocation2], %s347
        %p349 = pneg %p49
        %p350 = pneg %p46
        %s351 = sand.u32 %s28, 1
        %s352 = scalar_lea.sflag [#allocation6], %s351
        %s353 = sand.u32 %s62, 1
        %s354 = smul.addr %s353, 8
        %s355 = scalar_lea.vmem [#allocation5], %s354
        %p356 = pneg %p75
        %p357 = pneg %p72
        %p358 = scmp.lt.s32.totalorder %s28, 2
        %s359 = scalar_select %p358, %s28, 2
        %s360 = smul.addr %s359, 4
        %s361 = scalar_lea.vmem %s2, %s360
        %p362 = pneg %p101
        %p363 = pneg %p98
        %p364 = pneg %p122
        %p365 = pneg %p119
        %p366 = pneg %p143
        %p367 = pneg %p140
        %p368 = pneg %p164
        %p369 = pneg %p161
        %p370 = pneg %p185
        %p371 = pneg %p182
        %p372 = pneg %p211
        %p373 = pneg %p208
        %s374 = sand.u32 %s198, 1
        %s375 = scalar_lea.sflag [#allocation4], %s374
        %s376 = sand.u32 %s198, 1
        %s377 = smul.addr %s376, 8
        %s378 = scalar_lea.vmem [#allocation10], %s377
        %p379 = scmp.lt.s32.totalorder %s28, 2
        %s380 = scalar_select %p379, %s28, 2
        %s381 = smul.addr %s380, 4
        %s382 = scalar_lea.vmem %s2, %s381
        %v384 = vld [vmem:[%s322] sm:$0xff]
        %v385 = vld [vmem:[%s322 + $0x8] sm:$0xff]
        %v386 = vpack.c.bf16 %v385, %v384
        %v387 = vld [vmem:[#allocation8] sm:$0xf]
        %v388 = vld [vmem:[#allocation8 + $0x4] sm:$0xf]
        %v391 = vunpack.c.l.b16 %v387
        %v392 = vunpack.c.l.b16 %v388
        %v393 = vpack.c.b16 %v392, %v391
        %vm395 = vcmask 130048
        %v397 = vsel %vm395, %v386, 0
        %399 = vmatprep.subr.bf16.mxu0 0
        %400 = vmatpush1.bf16.msra.mxu0 0
        %401 = vmatprep.subr.bf16.mxu0 0
        %402 = vmatpush1.bf16.msra.mxu0 0
        %403 = vmatprep.subr.bf16.mxu0 0
        %404 = vmatpush1.bf16.msra.mxu0 0
        %405 = vmatprep.subr.bf16.mxu0 0
        %406 = vmatpush1.bf16.msra.mxu0 0
        %407 = vmatprep.subr.bf16.mxu0 0
        %408 = vmatpush1.bf16.msra.mxu0 0
        %409 = vmatprep.subr.bf16.mxu0 0
        %410 = vmatpush1.bf16.msra.mxu0 0
        %411 = vmatprep.subr.bf16.mxu0 0
        %412 = vmatpush1.bf16.msra.mxu0 0
        %413 = vmatprep.subr.bf16.mxu0 0
        %414 = vmatpush1.bf16.msra.mxu0 %v393
        %415 = vmatprep.subr.bf16.mxu0 0
        %416 = vmatpush2.bf16.msra.mxu0 0
        %417 = vmatprep.subr.bf16.mxu0 0
        %418 = vmatpush2.bf16.msra.mxu0 0
        %419 = vmatprep.subr.bf16.mxu0 0
        %420 = vmatpush2.bf16.msra.mxu0 0
        %421 = vmatprep.subr.bf16.mxu0 0
        %422 = vmatpush2.bf16.msra.mxu0 0
        %423 = vmatprep.subr.bf16.mxu0 0
        %424 = vmatpush2.bf16.msra.mxu0 0
        %425 = vmatprep.subr.bf16.mxu0 0
        %426 = vmatpush2.bf16.msra.mxu0 0
        %427 = vmatprep.subr.bf16.mxu0 0
        %428 = vmatpush2.bf16.msra.mxu0 0
        %429 = vmatprep.subr.bf16.mxu0 0
        %430 = vmatpush2.bf16.msra.mxu0 0
        %431 = vmatprep.mubr.bf16.mxu0 0
        %432 = vmatmul.mubr.bf16.gmra.mxu0 %v397
        %v433 = vpop.f32.mrf.mxu0
        %v434 = vadd.f32 0.0, %v433
        %v435 = vpop.f32.mrf.mxu0
        %v436 = vpop.f32.mrf.mxu0
        %v437 = vadd.f32 0.0, %v436
        %v438 = vpop.f32.mrf.mxu0
        %439 = vdwg.mxu0
        %v440 = vld [vmem:[#allocation7] sm:$0xf]
        %v441 = vld [vmem:[#allocation7 + $0x4] sm:$0xf]
        %v442 = vpack.c.bf16 %v437, %v434
        %v443 = vld [vmem:[%s331] sm:$0xf]
        %v444 = vld [vmem:[%s331 + $0x4] sm:$0xf]
        %v445 = vunpack.c.l.bf16 %v443
        %v446 = vunpack.c.l.bf16 %v444
        %v449 = vunpack.c.l.b16 %v440
        %v450 = vunpack.c.l.b16 %v441
        %v451 = vpack.c.b16 %v450, %v449
        %v453 = vsel %vm395, %v451, 0
        %455 = vmatprep.subr.bf16.mxu0 0
        %456 = vmatpush1.bf16.msra.mxu0 0
        %457 = vmatprep.subr.bf16.mxu0 0
        %458 = vmatpush1.bf16.msra.mxu0 0
        %459 = vmatprep.subr.bf16.mxu0 0
        %460 = vmatpush1.bf16.msra.mxu0 0
        %461 = vmatprep.subr.bf16.mxu0 0
        %462 = vmatpush1.bf16.msra.mxu0 0
        %463 = vmatprep.subr.bf16.mxu0 0
        %464 = vmatpush1.bf16.msra.mxu0 0
        %465 = vmatprep.subr.bf16.mxu0 0
        %466 = vmatpush1.bf16.msra.mxu0 0
        %467 = vmatprep.subr.bf16.mxu0 0
        %468 = vmatpush1.bf16.msra.mxu0 0
        %469 = vmatprep.subr.bf16.mxu0 0
        %470 = vmatpush1.bf16.msra.mxu0 %v442
        %471 = vmatprep.subr.bf16.mxu0 0
        %472 = vmatpush2.bf16.msra.mxu0 0
        %473 = vmatprep.subr.bf16.mxu0 0
        %474 = vmatpush2.bf16.msra.mxu0 0
        %475 = vmatprep.subr.bf16.mxu0 0
        %476 = vmatpush2.bf16.msra.mxu0 0
        %477 = vmatprep.subr.bf16.mxu0 0
        %478 = vmatpush2.bf16.msra.mxu0 0
        %479 = vmatprep.subr.bf16.mxu0 0
        %480 = vmatpush2.bf16.msra.mxu0 0
        %481 = vmatprep.subr.bf16.mxu0 0
        %482 = vmatpush2.bf16.msra.mxu0 0
        %483 = vmatprep.subr.bf16.mxu0 0
        %484 = vmatpush2.bf16.msra.mxu0 0
        %485 = vmatprep.subr.bf16.mxu0 0
        %486 = vmatpush2.bf16.msra.mxu0 0
        %487 = vmatprep.mubr.bf16.mxu0 0
        %488 = vmatmul.mubr.bf16.gmra.mxu0 %v453
        %v489 = vpop.f32.mrf.mxu0
        %v490 = vadd.f32 %v445, %v489
        %v491 = vpop.f32.mrf.mxu0
        %v492 = vpop.f32.mrf.mxu0
        %v493 = vadd.f32 %v446, %v492
        %v494 = vpop.f32.mrf.mxu0
        %495 = vdwg.mxu0
        %v496 = vmax.f32 %v490, 0.0
        %v497 = vmax.f32 %v493, 0.0
        %v498 = vmin.f32 %v496, 1.0
        %v499 = vmin.f32 %v497, 1.0
        %v500 = vpack.c.bf16 %v499, %v498
        %v501 = vld [vmem:[%s6] sm:$0xf]
        %v502 = vld [vmem:[%s6 + $0x4] sm:$0xf]
        %v505 = vunpack.c.l.b16 %v501
        %v506 = vunpack.c.l.b16 %v502
        %v507 = vpack.c.b16 %v506, %v505
        %v510 = vsel %vm395, %v500, 0
        %512 = vmatprep.subr.bf16.mxu0 0
        %513 = vmatpush1.bf16.msra.mxu0 0
        %514 = vmatprep.subr.bf16.mxu0 0
        %515 = vmatpush1.bf16.msra.mxu0 0
        %516 = vmatprep.subr.bf16.mxu0 0
        %517 = vmatpush1.bf16.msra.mxu0 0
        %518 = vmatprep.subr.bf16.mxu0 0
        %519 = vmatpush1.bf16.msra.mxu0 0
        %520 = vmatprep.subr.bf16.mxu0 0
        %521 = vmatpush1.bf16.msra.mxu0 0
        %522 = vmatprep.subr.bf16.mxu0 0
        %523 = vmatpush1.bf16.msra.mxu0 0
        %524 = vmatprep.subr.bf16.mxu0 0
        %525 = vmatpush1.bf16.msra.mxu0 0
        %526 = vmatprep.subr.bf16.mxu0 0
        %527 = vmatpush1.bf16.msra.mxu0 %v507
        %528 = vmatprep.subr.bf16.mxu0 0
        %529 = vmatpush2.bf16.msra.mxu0 0
        %530 = vmatprep.subr.bf16.mxu0 0
        %531 = vmatpush2.bf16.msra.mxu0 0
        %532 = vmatprep.subr.bf16.mxu0 0
        %533 = vmatpush2.bf16.msra.mxu0 0
        %534 = vmatprep.subr.bf16.mxu0 0
        %535 = vmatpush2.bf16.msra.mxu0 0
        %536 = vmatprep.subr.bf16.mxu0 0
        %537 = vmatpush2.bf16.msra.mxu0 0
        %538 = vmatprep.subr.bf16.mxu0 0
        %539 = vmatpush2.bf16.msra.mxu0 0
        %540 = vmatprep.subr.bf16.mxu0 0
        %541 = vmatpush2.bf16.msra.mxu0 0
        %542 = vmatprep.subr.bf16.mxu0 0
        %543 = vmatpush2.bf16.msra.mxu0 0
        %544 = vmatprep.mubr.bf16.mxu0 0
        %545 = vmatmul.mubr.bf16.gmra.mxu0 %v510
        %v546 = vpop.f32.mrf.mxu0
        %v547 = vadd.f32 0.0, %v546
        %v548 = vpop.f32.mrf.mxu0
        %v549 = vpop.f32.mrf.mxu0
        %v550 = vadd.f32 0.0, %v549
        %v551 = vpop.f32.mrf.mxu0
        %552 = vdwg.mxu0
        %v553 = vld [vmem:[%s5] sm:$0xf]
        %v554 = vpack.c.bf16 %v550, %v547
        %v555 = vld [vmem:[%s382] sm:$0xf]
        %v556 = vunpack.c.l.bf16 %v555
        %v558 = vsel %vm395, %v553, 0
        %560 = vmatprep.subr.bf16.mxu0 0
        %561 = vmatpush1.bf16.msra.mxu0 0
        %562 = vmatprep.subr.bf16.mxu0 0
        %563 = vmatpush1.bf16.msra.mxu0 0
        %564 = vmatprep.subr.bf16.mxu0 0
        %565 = vmatpush1.bf16.msra.mxu0 0
        %566 = vmatprep.subr.bf16.mxu0 0
        %567 = vmatpush1.bf16.msra.mxu0 0
        %568 = vmatprep.subr.bf16.mxu0 0
        %569 = vmatpush1.bf16.msra.mxu0 0
        %570 = vmatprep.subr.bf16.mxu0 0
        %571 = vmatpush1.bf16.msra.mxu0 0
        %572 = vmatprep.subr.bf16.mxu0 0
        %573 = vmatpush1.bf16.msra.mxu0 0
        %574 = vmatprep.subr.bf16.mxu0 0
        %575 = vmatpush1.bf16.msra.mxu0 %v554
        %576 = vmatprep.subr.bf16.mxu0 0
        %577 = vmatpush2.bf16.msra.mxu0 0
        %578 = vmatprep.subr.bf16.mxu0 0
        %579 = vmatpush2.bf16.msra.mxu0 0
        %580 = vmatprep.subr.bf16.mxu0 0
        %581 = vmatpush2.bf16.msra.mxu0 0
        %582 = vmatprep.subr.bf16.mxu0 0
        %583 = vmatpush2.bf16.msra.mxu0 0
        %584 = vmatprep.subr.bf16.mxu0 0
        %585 = vmatpush2.bf16.msra.mxu0 0
        %586 = vmatprep.subr.bf16.mxu0 0
        %587 = vmatpush2.bf16.msra.mxu0 0
        %588 = vmatprep.subr.bf16.mxu0 0
        %589 = vmatpush2.bf16.msra.mxu0 0
        %590 = vmatprep.subr.bf16.mxu0 0
        %591 = vmatpush2.bf16.msra.mxu0 0
        %592 = vmatprep.mubr.bf16.mxu0 0
        %593 = vmatmul.mubr.bf16.gmra.mxu0 %v558
        %v594 = vpop.f32.mrf.mxu0
        %v595 = vadd.f32 %v556, %v594
        %v596 = vpop.f32.mrf.mxu0
        %v597 = vpop.f32.mrf.mxu0
        %v598 = vpop.f32.mrf.mxu0
        %599 = vdwg.mxu0
        %v600 = vmax.f32 %v595, 0.0
        %v601 = vmin.f32 %v600, 1.0
        %v602 = vmul.f32 %v601, 255.0
        %v603 = vround.ne.pseudo %v602
        %v604 = vmul.f32 %v603, 0.003921569
        %vm605 = vcmask 64512
        %606 = vst.msk [vmem:[%s378] sm:$0xff] %vm605, %v604
        %s607 = sand.u32 %s198, 1
        %s608 = scalar_lea.sflag [#allocation4], %s607
        %s609 = sand.u32 %s198, 1
        %s610 = smul.addr %s609, 8
        %s611 = scalar_lea.vmem [#allocation10], %s610
        // Predicated region
        $region65: #{tpu_custom_call.1} parent=47 // pred_check
          %p612 = pneg %p208
        $region66: #{tpu_custom_call.1} parent=47 // pred_check_branch
          %614 = sbr.rel (%p612) target = $region68
        $region67: #{tpu_custom_call.1} parent=47 // pred_region
          %s616 = ssub.s32 128, 128
          %617 = vsyncadd %s608, %s616
          %s618 = smul.addr %s28, 128
          %s619 = scalar_lea.hbm %s7, %s618
          %s621 = sshll.u32 %s611, 4
          %s622 = int_to_ptr.vmem [resolvable:$true] %s621
          %624 = dma.vmem_to_hbm [thread:$0]  %s622, 128, %s619, %s608
        $region68: #{tpu_custom_call.1} parent=47 // pred_fallthru
          _
      $region48: #{tpu_custom_call.1} parent=5 // pred_fallthru
        _
      %p625 = scmp.le.s32.totalorder 2, %s23
      // Predicated region
      $region69: #{tpu_custom_call.1} parent=5 // pred_check
        %p626 = pneg %p625
      $region70: #{tpu_custom_call.1} parent=5 // pred_check_branch
        %628 = sbr.rel (%p626) target = $region72
      $region71: #{tpu_custom_call.1} parent=5 // pred_region
        %s629 = ssub.s32 %s23, 2
        // Predicated region
        $region73: #{tpu_custom_call.1} parent=71 // pred_check
          %p630 = pneg %p214
        $region74: #{tpu_custom_call.1} parent=71 // pred_check_branch
          %632 = sbr.rel (%p630) target = $region76
        $region75: #{tpu_custom_call.1} parent=71 // pred_region
          %s633 = sand.u32 %s199, 1
          %s634 = scalar_lea.sflag [#allocation4], %s633
          %s635 = sand.u32 %s199, 1
          %s636 = smul.addr %s635, 8
          %s637 = scalar_lea.vmem [#allocation10], %s636
          %638 = dma.done %s634, 128
        $region76: #{tpu_custom_call.1} parent=71 // pred_fallthru
          _
      $region72: #{tpu_custom_call.1} parent=5 // pred_fallthru
        _
    $region6: #{tpu_custom_call.1} parent=1 // loop_footer
      %s27 = sadd.s32 1, %s23
    $region7: #{tpu_custom_call.1} parent=1 // loop_footer_branch
      %22 = sbr.rel target = $region3
    $region8: #{tpu_custom_call.1} parent=1 // loop_exit
      _
    %639 = vsyncpa [#allocation3], 1
    %s640 = scalar_lea.sflag [#allocation3], 1
    %641 = vsyncpa %s640, 1
    %642 = vsyncpa [#allocation6], 1
    %s643 = scalar_lea.sflag [#allocation6], 1
    %644 = vsyncpa %s643, 1
    %645 = vsyncpa [#allocation9], 1
    %646 = vsyncpa [#allocation4], 1
    %s647 = scalar_lea.sflag [#allocation4], 1
    %648 = vsyncpa %s647, 1

</llo_original>
